<compile_context>
chip_gen: v7x
topology: tpu7x:2x2x1
jax: 0.10.0
libtpu: 0.0.40
codegen_flags: <defaults>
</compile_context>

<pallas_src>
import functools

import jax
import jax.numpy as jnp
import numpy as np
from jax.experimental import pallas as pl
from jax.experimental.pallas import tpu as pltpu


# ----------------------------- fused Pallas kernel --------------------------


def _fused_kernel(gamma_ref, x_ref, xt_ref, wth_ref, wpg_ref, wo_ref, out_ref,
                  *, C, W):
    C8, C2, W4 = C // 8, C // 2, W // 4
    H8, H2, W2 = C8 // 2, C2 // 2, W // 2

    x = x_ref[0]                                  # (C, W) f32, width even-first
    x_bf = x.astype(jnp.bfloat16)
    xt = xt_ref[0]                                # (W, C) bf16, same width order

    # Fused phi/g 1x1 convs: one MXU matmul; rows = [g (even,odd ch), phi (...)].
    proj = jnp.dot(wpg_ref[...], x_bf, preferred_element_type=jnp.float32)  # (C2+C8, W)
    g = proj[:C2]                                 # (C2, W)
    phi = proj[C2:]                               # (C8, W)

    # theta produced already transposed: (W, C8), channels even-first.
    theta_t = jnp.dot(xt, wth_ref[...], preferred_element_type=jnp.float32)

    # 2x2 MaxPool over (channel, width).  Channels and widths are both ordered
    # even-first, so the four pooling quadrants are contiguous slices.
    phi_p = jnp.maximum(jnp.maximum(phi[:H8, :W2], phi[:H8, W2:]),
                        jnp.maximum(phi[H8:, :W2], phi[H8:, W2:]))   # (H8, W2)
    g_p = jnp.maximum(jnp.maximum(g[:H2, :W2], g[:H2, W2:]),
                      jnp.maximum(g[H2:, :W2], g[H2:, W2:]))         # (H2, W2)

    # Attention logits: theta^T @ phi_v.  PyTorch's .view(C8, W4) maps pooled
    # row i / half h to view-channel 2i+h; those halves pair exactly with the
    # even/odd theta channel groups (already grouped by the weight reorder).
    th_bf = theta_t.astype(jnp.bfloat16)
    phi_bf = phi_p.astype(jnp.bfloat16)
    logits = (jnp.dot(th_bf[:, :H8], phi_bf[:, :W4],
                      preferred_element_type=jnp.float32) +
              jnp.dot(th_bf[:, H8:], phi_bf[:, W4:],
                      preferred_element_type=jnp.float32))           # (W, W4)

    # Softmax over keys (f32; exp + approximate reciprocal go to the EUP).
    m = jnp.max(logits, axis=-1, keepdims=True)
    e = jnp.exp(logits - m)
    attn = e * pl.reciprocal(jnp.sum(e, axis=-1, keepdims=True), approx=True)

    # attn_g = g_v @ attn^T, split into the two pooled halves, then the 1x1
    # output conv with matching even/odd column groups of w_o.
    attn_bf = attn.astype(jnp.bfloat16)
    g_bf = g_p.astype(jnp.bfloat16)
    dn = (((1,), (1,)), ((), ()))                 # contract the key axis of both
    ag_even = jax.lax.dot_general(g_bf[:, :W4], attn_bf, dn,
                                  preferred_element_type=jnp.float32)  # (H2, W)
    ag_odd = jax.lax.dot_general(g_bf[:, W4:], attn_bf, dn,
                                 preferred_element_type=jnp.float32)   # (H2, W)
    wo = wo_ref[...]                              # (C, C2), columns even-first
    o = (jnp.dot(wo[:, :H2], ag_even.astype(jnp.bfloat16),
                 preferred_element_type=jnp.float32) +
         jnp.dot(wo[:, H2:], ag_odd.astype(jnp.bfloat16),
                 preferred_element_type=jnp.float32))                  # (C, W)

    # gamma-scaled residual in f32.
    out_ref[0] = x + gamma_ref[0] * o


# --------------------------------- wrapper ----------------------------------


def _spectral_normalize(w, eps=1e-12):
    """Spectral norm of a 1x1 Conv1d weight viewed as an (out, in) matrix."""
    # TODO(synk): PyTorch's spectral_norm uses power iteration; SVD is a
    # deterministic stand-in for this parameter preparation step.
    sigma = jnp.linalg.svd(w, compute_uv=False)[0]
    return w / jnp.maximum(sigma, eps)


@jax.jit
def non_local_self_attention(x, w_theta, w_phi, w_g, w_o, gamma):
    B, C, W = x.shape
    C8, C2 = C // 8, C // 2

    # Static layout plumbing (done once by XLA outside the kernel):
    #   * width axis reordered even-columns-first,
    #   * phi/g/theta out-channels reordered even-first (weight rows),
    #   * w_o columns reordered to match,
    # so the in-kernel maxpool + .view() become contiguous slices + max.
    sig = np.concatenate([np.arange(0, W, 2), np.arange(1, W, 2)])
    inv_sig = np.argsort(sig)
    p8 = np.concatenate([np.arange(0, C8, 2), np.arange(1, C8, 2)])
    p2 = np.concatenate([np.arange(0, C2, 2), np.arange(1, C2, 2)])

    x_p = x[:, :, sig]                                          # (B, C, W) f32
    xt_p = jnp.transpose(x_p, (0, 2, 1)).astype(jnp.bfloat16)   # (B, W, C)
    wth_t = jnp.transpose(w_theta[p8]).astype(jnp.bfloat16)     # (C, C8)
    wpg = jnp.concatenate([w_g[p2], w_phi[p8]],
                          axis=0).astype(jnp.bfloat16)          # (C2+C8, C)
    wo_r = w_o[:, p2].astype(jnp.bfloat16)                      # (C, C2)

    kernel = functools.partial(_fused_kernel, C=C, W=W)
    out_p = pl.pallas_call(
        kernel,
        out_shape=jax.ShapeDtypeStruct((B, C, W), jnp.float32),
        grid=(B,),
        in_specs=[
            pl.BlockSpec(memory_space=pltpu.MemorySpace.SMEM),   # gamma scalar
            pl.BlockSpec((1, C, W), lambda b: (b, 0, 0)),        # x   (permuted)
            pl.BlockSpec((1, W, C), lambda b: (b, 0, 0)),        # x^T (permuted)
            pl.BlockSpec((C, C8), lambda b: (0, 0)),             # W_theta^T
            pl.BlockSpec((C2 + C8, C), lambda b: (0, 0)),        # [W_g; W_phi]
            pl.BlockSpec((C, C2), lambda b: (0, 0)),             # W_o
        ],
        out_specs=pl.BlockSpec((1, C, W), lambda b: (b, 0, 0)),
        compiler_params=pltpu.CompilerParams(
            dimension_semantics=("parallel",)),
    )(gamma, x_p, xt_p, wth_t, wpg, wo_r)

    # Undo the width permutation.
    return out_p[:, :, inv_sig]


# ------------------------------- reference ----------------------------------


def _reference(x, w_theta, w_phi, w_g, w_o, gamma):
    """Pure-JAX f32 reference of the PyTorch forward."""
    B, C, W = x.shape
    C8, C2, W4 = C // 8, C // 2, W // 4

    def maxpool2x2(t):
        b, c, w = t.shape
        return jnp.max(t.reshape(b, c // 2, 2, w // 2, 2), axis=(2, 4))

    theta = jnp.einsum('oc,bcw->bow', w_theta, x)
    phi = maxpool2x2(jnp.einsum('oc,bcw->bow', w_phi, x)).reshape(B, C8, W4)
    attn = jax.nn.softmax(jnp.einsum('bcw,bcm->bwm', theta, phi), axis=-1)
    g = maxpool2x2(jnp.einsum('oc,bcw->bow', w_g, x)).reshape(B, C2, W4)
    attn_g = jnp.einsum('bcm,bwm->bcw', g, attn)
    o = jnp.einsum('oc,bcw->bow', w_o, attn_g)
    return x + gamma[0] * o


# ---------------------------------- main -------------------------------------


if __name__ == "__main__":
    B, C, W = 2, 32, 32        # C must be divisible by 16, W by 4
    key = jax.random.PRNGKey(0)
    kx, kt, kp, kg, ko = jax.random.split(key, 5)

    x = jax.random.normal(kx, (B, C, W), dtype=jnp.float32)

    # 1x1 Conv1d weights stored as (out, in) matrices, spectral-normalized.
    w_theta = _spectral_normalize(
        jax.random.normal(kt, (C // 8, C), dtype=jnp.float32) * 0.1)
    w_phi = _spectral_normalize(
        jax.random.normal(kp, (C // 8, C), dtype=jnp.float32) * 0.1)
    w_g = _spectral_normalize(
        jax.random.normal(kg, (C // 2, C), dtype=jnp.float32) * 0.1)
    w_o = _spectral_normalize(
        jax.random.normal(ko, (C, C // 2), dtype=jnp.float32) * 0.1)

    # PyTorch initializes gamma to 0 (out == x); use a nonzero value so the
    # attention path is actually exercised.
    gamma = jnp.array([0.5], dtype=jnp.float32)

    out = jax.block_until_ready(
        non_local_self_attention(x, w_theta, w_phi, w_g, w_o, gamma))

    ref = _reference(x, w_theta, w_phi, w_g, w_o, gamma)
    # bf16 MXU operands + approx reciprocal -> loosened tolerance vs f32 ref.
    np.testing.assert_allclose(np.asarray(out), np.asarray(ref),
                               rtol=2e-2, atol=2e-2)
    print("KERNEL_OK")
</pallas_src>

<mosaic_0001>
module attributes {stable_mosaic.version = 11 : i64} {
  func.func @_fused_kernel(%arg0: i32, %arg1: memref<1xf32, #tpu.memory_space<smem>>, %arg2: memref<1x32x32xf32, #tpu.memory_space<vmem>>, %arg3: memref<1x32x32xbf16, #tpu.memory_space<vmem>>, %arg4: memref<32x4xbf16, #tpu.memory_space<vmem>>, %arg5: memref<20x32xbf16, #tpu.memory_space<vmem>>, %arg6: memref<32x16xbf16, #tpu.memory_space<vmem>>, %arg7: memref<1x32x32xf32, #tpu.memory_space<vmem>>) attributes {dimension_semantics = [#tpu.dimension_semantics<parallel>], iteration_bounds = array<i64: 2>, scalar_prefetch = 0 : i64, scratch_operands = 0 : i64, tpu.core_type = #tpu.core_type<tc>, window_params = [{transform_indices = @transform_0, window_bounds = array<i64: 1>}, {transform_indices = @transform_1, window_bounds = array<i64: 1, 32, 32>}, {transform_indices = @transform_2, window_bounds = array<i64: 1, 32, 32>}, {pipeline_mode = #tpu.pipeline_mode<synchronous>, transform_indices = @transform_3, window_bounds = array<i64: 32, 4>}, {pipeline_mode = #tpu.pipeline_mode<synchronous>, transform_indices = @transform_4, window_bounds = array<i64: 20, 32>}, {pipeline_mode = #tpu.pipeline_mode<synchronous>, transform_indices = @transform_5, window_bounds = array<i64: 32, 16>}, {transform_indices = @transform_6, window_bounds = array<i64: 1, 32, 32>}]} {
    %c0 = arith.constant 0 : index
    %c0_0 = arith.constant 0 : index
    %c0_1 = arith.constant 0 : index
    %0 = vector.load %arg2[%c0, %c0_0, %c0_1] : memref<1x32x32xf32, #tpu.memory_space<vmem>>, vector<1x32x32xf32>
    %1 = vector.shape_cast %0 : vector<1x32x32xf32> to vector<32x32xf32>
    %2 = arith.truncf %1 : vector<32x32xf32> to vector<32x32xbf16>
    %c0_2 = arith.constant 0 : index
    %c0_3 = arith.constant 0 : index
    %c0_4 = arith.constant 0 : index
    %3 = vector.load %arg3[%c0_2, %c0_3, %c0_4] : memref<1x32x32xbf16, #tpu.memory_space<vmem>>, vector<1x32x32xbf16>
    %4 = vector.shape_cast %3 : vector<1x32x32xbf16> to vector<32x32xbf16>
    %c0_5 = arith.constant 0 : index
    %c0_6 = arith.constant 0 : index
    %5 = vector.load %arg5[%c0_5, %c0_6] : memref<20x32xbf16, #tpu.memory_space<vmem>>, vector<20x32xbf16>
    %cst = arith.constant dense<0.000000e+00> : vector<20x32xf32>
    %6 = tpu.matmul %5, %2, %cst {dimension_numbers = #tpu.dot_dimension_numbers<[1], [0], [0], [1], [0, 0, 1, 1], [], []>} : vector<20x32xbf16>, vector<32x32xbf16>, vector<20x32xf32> -> vector<20x32xf32>
    %7 = vector.extract_strided_slice %6 {offsets = [0, 0], sizes = [16, 32], strides = [1, 1]} : vector<20x32xf32> to vector<16x32xf32>
    %8 = vector.extract_strided_slice %6 {offsets = [16, 0], sizes = [4, 32], strides = [1, 1]} : vector<20x32xf32> to vector<4x32xf32>
    %c0_7 = arith.constant 0 : index
    %c0_8 = arith.constant 0 : index
    %9 = vector.load %arg4[%c0_7, %c0_8] : memref<32x4xbf16, #tpu.memory_space<vmem>>, vector<32x4xbf16>
    %cst_9 = arith.constant dense<0.000000e+00> : vector<32x4xf32>
    %10 = tpu.matmul %4, %9, %cst_9 {dimension_numbers = #tpu.dot_dimension_numbers<[1], [0], [0], [1], [0, 0, 1, 1], [], []>} : vector<32x32xbf16>, vector<32x4xbf16>, vector<32x4xf32> -> vector<32x4xf32>
    %11 = vector.extract_strided_slice %8 {offsets = [0, 0], sizes = [2, 16], strides = [1, 1]} : vector<4x32xf32> to vector<2x16xf32>
    %12 = vector.extract_strided_slice %8 {offsets = [0, 16], sizes = [2, 16], strides = [1, 1]} : vector<4x32xf32> to vector<2x16xf32>
    %13 = arith.maximumf %11, %12 : vector<2x16xf32>
    %14 = vector.extract_strided_slice %8 {offsets = [2, 0], sizes = [2, 16], strides = [1, 1]} : vector<4x32xf32> to vector<2x16xf32>
    %15 = vector.extract_strided_slice %8 {offsets = [2, 16], sizes = [2, 16], strides = [1, 1]} : vector<4x32xf32> to vector<2x16xf32>
    %16 = arith.maximumf %14, %15 : vector<2x16xf32>
    %17 = arith.maximumf %13, %16 : vector<2x16xf32>
    %18 = vector.extract_strided_slice %7 {offsets = [0, 0], sizes = [8, 16], strides = [1, 1]} : vector<16x32xf32> to vector<8x16xf32>
    %19 = vector.extract_strided_slice %7 {offsets = [0, 16], sizes = [8, 16], strides = [1, 1]} : vector<16x32xf32> to vector<8x16xf32>
    %20 = arith.maximumf %18, %19 : vector<8x16xf32>
    %21 = vector.extract_strided_slice %7 {offsets = [8, 0], sizes = [8, 16], strides = [1, 1]} : vector<16x32xf32> to vector<8x16xf32>
    %22 = vector.extract_strided_slice %7 {offsets = [8, 16], sizes = [8, 16], strides = [1, 1]} : vector<16x32xf32> to vector<8x16xf32>
    %23 = arith.maximumf %21, %22 : vector<8x16xf32>
    %24 = arith.maximumf %20, %23 : vector<8x16xf32>
    %25 = arith.truncf %10 : vector<32x4xf32> to vector<32x4xbf16>
    %26 = arith.truncf %17 : vector<2x16xf32> to vector<2x16xbf16>
    %27 = vector.extract_strided_slice %25 {offsets = [0, 0], sizes = [32, 2], strides = [1, 1]} : vector<32x4xbf16> to vector<32x2xbf16>
    %28 = vector.extract_strided_slice %26 {offsets = [0, 0], sizes = [2, 8], strides = [1, 1]} : vector<2x16xbf16> to vector<2x8xbf16>
    %cst_10 = arith.constant dense<0.000000e+00> : vector<32x8xf32>
    %29 = tpu.matmul %27, %28, %cst_10 {dimension_numbers = #tpu.dot_dimension_numbers<[1], [0], [0], [1], [0, 0, 1, 1], [], []>} : vector<32x2xbf16>, vector<2x8xbf16>, vector<32x8xf32> -> vector<32x8xf32>
    %30 = vector.extract_strided_slice %25 {offsets = [0, 2], sizes = [32, 2], strides = [1, 1]} : vector<32x4xbf16> to vector<32x2xbf16>
    %31 = vector.extract_strided_slice %26 {offsets = [0, 8], sizes = [2, 8], strides = [1, 1]} : vector<2x16xbf16> to vector<2x8xbf16>
    %cst_11 = arith.constant dense<0.000000e+00> : vector<32x8xf32>
    %32 = tpu.matmul %30, %31, %cst_11 {dimension_numbers = #tpu.dot_dimension_numbers<[1], [0], [0], [1], [0, 0, 1, 1], [], []>} : vector<32x2xbf16>, vector<2x8xbf16>, vector<32x8xf32> -> vector<32x8xf32>
    %33 = arith.addf %29, %32 : vector<32x8xf32>
    %cst_12 = arith.constant dense<0xFF800000> : vector<32xf32>
    %34 = vector.multi_reduction <maximumf>, %33, %cst_12 [1] : vector<32x8xf32> to vector<32xf32>
    %35 = vector.shape_cast %34 : vector<32xf32> to vector<32x1xf32>
    %36 = vector.broadcast %35 : vector<32x1xf32> to vector<32x8xf32>
    %37 = arith.subf %33, %36 : vector<32x8xf32>
    %38 = math.exp %37 : vector<32x8xf32>
    %cst_13 = arith.constant dense<0.000000e+00> : vector<32xf32>
    %39 = vector.multi_reduction <add>, %38, %cst_13 [1] : vector<32x8xf32> to vector<32xf32>
    %40 = vector.shape_cast %39 : vector<32xf32> to vector<32x1xf32>
    %41 = tpu.reciprocal %40 {approx = true} : vector<32x1xf32> -> vector<32x1xf32>
    %42 = vector.broadcast %41 : vector<32x1xf32> to vector<32x8xf32>
    %43 = arith.mulf %38, %42 : vector<32x8xf32>
    %44 = arith.truncf %43 : vector<32x8xf32> to vector<32x8xbf16>
    %45 = arith.truncf %24 : vector<8x16xf32> to vector<8x16xbf16>
    %46 = vector.extract_strided_slice %45 {offsets = [0, 0], sizes = [8, 8], strides = [1, 1]} : vector<8x16xbf16> to vector<8x8xbf16>
    %cst_14 = arith.constant dense<0.000000e+00> : vector<8x32xf32>
    %47 = tpu.matmul %46, %44, %cst_14 {dimension_numbers = #tpu.dot_dimension_numbers<[1], [1], [0], [0], [0, 0, 1, 0], [], []>} : vector<8x8xbf16>, vector<32x8xbf16>, vector<8x32xf32> -> vector<8x32xf32>
    %48 = vector.extract_strided_slice %45 {offsets = [0, 8], sizes = [8, 8], strides = [1, 1]} : vector<8x16xbf16> to vector<8x8xbf16>
    %cst_15 = arith.constant dense<0.000000e+00> : vector<8x32xf32>
    %49 = tpu.matmul %48, %44, %cst_15 {dimension_numbers = #tpu.dot_dimension_numbers<[1], [1], [0], [0], [0, 0, 1, 0], [], []>} : vector<8x8xbf16>, vector<32x8xbf16>, vector<8x32xf32> -> vector<8x32xf32>
    %c0_16 = arith.constant 0 : index
    %c0_17 = arith.constant 0 : index
    %50 = vector.load %arg6[%c0_16, %c0_17] : memref<32x16xbf16, #tpu.memory_space<vmem>>, vector<32x16xbf16>
    %51 = vector.extract_strided_slice %50 {offsets = [0, 0], sizes = [32, 8], strides = [1, 1]} : vector<32x16xbf16> to vector<32x8xbf16>
    %52 = arith.truncf %47 : vector<8x32xf32> to vector<8x32xbf16>
    %cst_18 = arith.constant dense<0.000000e+00> : vector<32x32xf32>
    %53 = tpu.matmul %51, %52, %cst_18 {dimension_numbers = #tpu.dot_dimension_numbers<[1], [0], [0], [1], [0, 0, 1, 1], [], []>} : vector<32x8xbf16>, vector<8x32xbf16>, vector<32x32xf32> -> vector<32x32xf32>
    %54 = vector.extract_strided_slice %50 {offsets = [0, 8], sizes = [32, 8], strides = [1, 1]} : vector<32x16xbf16> to vector<32x8xbf16>
    %55 = arith.truncf %49 : vector<8x32xf32> to vector<8x32xbf16>
    %cst_19 = arith.constant dense<0.000000e+00> : vector<32x32xf32>
    %56 = tpu.matmul %54, %55, %cst_19 {dimension_numbers = #tpu.dot_dimension_numbers<[1], [0], [0], [1], [0, 0, 1, 1], [], []>} : vector<32x8xbf16>, vector<8x32xbf16>, vector<32x32xf32> -> vector<32x32xf32>
    %57 = arith.addf %53, %56 : vector<32x32xf32>
    %c0_20 = arith.constant 0 : index
    %58 = memref.load %arg1[%c0_20] : memref<1xf32, #tpu.memory_space<smem>>
    %59 = vector.broadcast %58 : f32 to vector<32x32xf32>
    %60 = arith.mulf %59, %57 : vector<32x32xf32>
    %61 = arith.addf %1, %60 : vector<32x32xf32>
    %c0_21 = arith.constant 0 : index
    %c0_22 = arith.constant 0 : index
    %c0_23 = arith.constant 0 : index
    %62 = vector.load %arg7[%c0_21, %c0_22, %c0_23] : memref<1x32x32xf32, #tpu.memory_space<vmem>>, vector<1x32x32xf32>
    %63 = vector.shape_cast %62 : vector<1x32x32xf32> to vector<32x32xf32>
    %64 = vector.shape_cast %61 : vector<32x32xf32> to vector<1x32x32xf32>
    tpu.vector_store %arg7[%c0_21, %c0_22, %c0_23], %64 {strides = array<i32>} : memref<1x32x32xf32, #tpu.memory_space<vmem>>, vector<1x32x32xf32>,
    return
  }
  func.func @transform_0(%arg0: i32) -> i32 {
    %c0_i32 = arith.constant 0 : i32
    %c0_i32_0 = arith.constant 0 : i32
    return %c0_i32 : i32
  }
  func.func @transform_1(%arg0: i32) -> (i32, i32, i32) {
    %c0_i32 = arith.constant 0 : i32
    %c0_i32_0 = arith.constant 0 : i32
    %c0_i32_1 = arith.constant 0 : i32
    return %arg0, %c0_i32, %c0_i32_0 : i32, i32, i32
  }
  func.func @transform_2(%arg0: i32) -> (i32, i32, i32) {
    %c0_i32 = arith.constant 0 : i32
    %c0_i32_0 = arith.constant 0 : i32
    %c0_i32_1 = arith.constant 0 : i32
    return %arg0, %c0_i32, %c0_i32_0 : i32, i32, i32
  }
  func.func @transform_3(%arg0: i32) -> (i32, i32) {
    %c0_i32 = arith.constant 0 : i32
    %c0_i32_0 = arith.constant 0 : i32
    %c0_i32_1 = arith.constant 0 : i32
    return %c0_i32, %c0_i32_0 : i32, i32
  }
  func.func @transform_4(%arg0: i32) -> (i32, i32) {
    %c0_i32 = arith.constant 0 : i32
    %c0_i32_0 = arith.constant 0 : i32
    %c0_i32_1 = arith.constant 0 : i32
    return %c0_i32, %c0_i32_0 : i32, i32
  }
  func.func @transform_5(%arg0: i32) -> (i32, i32) {
    %c0_i32 = arith.constant 0 : i32
    %c0_i32_0 = arith.constant 0 : i32
    %c0_i32_1 = arith.constant 0 : i32
    return %c0_i32, %c0_i32_0 : i32, i32
  }
  func.func @transform_6(%arg0: i32) -> (i32, i32, i32) {
    %c0_i32 = arith.constant 0 : i32
    %c0_i32_0 = arith.constant 0 : i32
    %c0_i32_1 = arith.constant 0 : i32
    return %arg0, %c0_i32, %c0_i32_0 : i32, i32, i32
  }
}

</mosaic_0001>

<llo_original>
// kernel: non_local_self_attention.1
$region0: #{non_local_self_attention.1}
  #allocation0 [shape = 'u32[]', space=smem, size = 0x4, offset = 0x4, fixed_abs, tag = 'smem constant byte address 0x4 - core index']
  #allocation1 [shape = 'u32[144,128]{1,0:T(1,128)}', space=vmem, size = 0x12000, scoped, tag = 'internal scratch']
  #allocation2 [shape = 'f32[1]{0:T(128)S(6)}', space=smem, size = 0x200, scoped, tag = 'scoped memory for non_local_self_attention.1']
  %s0 = inlined_call_operand.<no memory space> [shape: f32[1], index: 0, kind: input, shape index: {}]
  %s1 = inlined_call_operand.vmem [shape: f32[2,32,32], index: 1, kind: input, shape index: {}]
  %s2 = inlined_call_operand.vmem [shape: bf16[2,32,32], index: 2, kind: input, shape index: {}]
  %s3 = inlined_call_operand.vmem [shape: bf16[32,4], index: 3, kind: input, shape index: {}]
  %s4 = inlined_call_operand.vmem [shape: bf16[20,32], index: 4, kind: input, shape index: {}]
  %s5 = inlined_call_operand.vmem [shape: bf16[32,16], index: 5, kind: input, shape index: {}]
  %s6 = inlined_call_operand.vmem [shape: f32[2,32,32], index: 6, kind: output, shape index: {}]
  %s7 = sld [smem:[#allocation0]]
  $region57: #{non_local_self_attention.1} parent=0
    _
  %s9 = ssub.s32 1, %s7
  %s10 = scalar_select 0, %s9, %s7
  %11 = sst [smem:[#allocation2]] %s0
  loop: start=0, step=1, limit=4
  $region2: #{non_local_self_attention.1} parent=0 // loop_pre_header
    _
  $region3: #{non_local_self_attention.1} parent=0 // loop_header
    %s13 = sphi 0, %s17
    %p14 = scmp.ge.s32.totalorder %s13, 4
    %s21 = sphi 0, %s21
    %s23 = sphi 0, %s21
    %s24 = sphi 0, %s23
    %s38 = sphi 0, %s24
    %s44 = sphi 0, %s46
    %s47 = sphi 0, %s44
    %s48 = sphi 0, %s47
    %s64 = sphi 0, %s48
    %s70 = sphi 0, %s72
    %s73 = sphi 0, %s70
    %s74 = sphi 0, %s73
    %s90 = sphi 0, %s74
    %s94 = sphi 0, %s94
    %s96 = sphi 0, %s94
    %s97 = sphi 0, %s96
    %s111 = sphi 0, %s97
    %s115 = sphi 0, %s115
    %s117 = sphi 0, %s115
    %s118 = sphi 0, %s117
    %s132 = sphi 0, %s118
    %s136 = sphi 0, %s136
    %s138 = sphi 0, %s136
    %s139 = sphi 0, %s138
    %s153 = sphi 0, %s139
    %s159 = sphi 0, %s161
    %s162 = sphi 0, %s159
    %s163 = sphi 0, %s162
    %s179 = sphi 0, %s163
  $region4: #{non_local_self_attention.1} parent=0 // loop_header_branch
    %16 = sbr.rel (%p14) target = $region8
  $region5: #{non_local_self_attention.1} parent=0 // loop_body
    %s18 = ssub.s32 %s13, 1
    %s19 = ssub.s32 %s13, 2
    %s20 = sadd.s32 %s13, 1
    %s22 = sadd.s32 %s21, 1
    %p25 = scmp.eq.s32.totalorder %s13, 1
    %p26 = scmp.ne.s32.totalorder %s21, %s23
    %p27 = scmp.eq.s32.totalorder %s13, 0
    %p28 = por %p26, %p27
    %p29 = scmp.ne.s32.totalorder %s21, %s23
    %p30 = scmp.eq.s32.totalorder %s18, 1
    %p31 = por %p29, %p30
    %p32 = scmp.ne.s32.totalorder %s23, %s24
    %p33 = scmp.eq.s32.totalorder %s18, 0
    %p34 = por %p32, %p33
    %p35 = scmp.ne.s32.totalorder %s23, %s24
    %p36 = scmp.eq.s32.totalorder %s19, 1
    %p37 = por %p35, %p36
    %p39 = scmp.ne.s32.totalorder %s24, %s38
    %p40 = scmp.eq.s32.totalorder %s19, 0
    %p41 = por %p39, %p40
    %s42 = ssub.s32 %s13, %s20
    %p43 = scmp.eq.s32.totalorder %s42, 0
    %s45 = sadd.s32 %s44, 1
    %s46 = scalar_select %p43, %s44, %s45
    %p49 = pneg %p43
    %p50 = scmp.eq.s32.totalorder %s13, 1
    %p51 = por %p49, %p50
    %p52 = scmp.ne.s32.totalorder %s44, %s47
    %p53 = scmp.eq.s32.totalorder %s13, 0
    %p54 = por %p52, %p53
    %p55 = scmp.ne.s32.totalorder %s44, %s47
    %p56 = scmp.eq.s32.totalorder %s18, 1
    %p57 = por %p55, %p56
    %p58 = scmp.ne.s32.totalorder %s47, %s48
    %p59 = scmp.eq.s32.totalorder %s18, 0
    %p60 = por %p58, %p59
    %p61 = scmp.ne.s32.totalorder %s47, %s48
    %p62 = scmp.eq.s32.totalorder %s19, 1
    %p63 = por %p61, %p62
    %p65 = scmp.ne.s32.totalorder %s48, %s64
    %p66 = scmp.eq.s32.totalorder %s19, 0
    %p67 = por %p65, %p66
    %s68 = ssub.s32 %s13, %s20
    %p69 = scmp.eq.s32.totalorder %s68, 0
    %s71 = sadd.s32 %s70, 1
    %s72 = scalar_select %p69, %s70, %s71
    %p75 = pneg %p69
    %p76 = scmp.eq.s32.totalorder %s13, 1
    %p77 = por %p75, %p76
    %p78 = scmp.ne.s32.totalorder %s70, %s73
    %p79 = scmp.eq.s32.totalorder %s13, 0
    %p80 = por %p78, %p79
    %p81 = scmp.ne.s32.totalorder %s70, %s73
    %p82 = scmp.eq.s32.totalorder %s18, 1
    %p83 = por %p81, %p82
    %p84 = scmp.ne.s32.totalorder %s73, %s74
    %p85 = scmp.eq.s32.totalorder %s18, 0
    %p86 = por %p84, %p85
    %p87 = scmp.ne.s32.totalorder %s73, %s74
    %p88 = scmp.eq.s32.totalorder %s19, 1
    %p89 = por %p87, %p88
    %p91 = scmp.ne.s32.totalorder %s74, %s90
    %p92 = scmp.eq.s32.totalorder %s19, 0
    %p93 = por %p91, %p92
    %s95 = sadd.s32 %s94, 1
    %p98 = scmp.eq.s32.totalorder %s13, 1
    %p99 = scmp.ne.s32.totalorder %s94, %s96
    %p100 = scmp.eq.s32.totalorder %s13, 0
    %p101 = por %p99, %p100
    %p102 = scmp.ne.s32.totalorder %s94, %s96
    %p103 = scmp.eq.s32.totalorder %s18, 1
    %p104 = por %p102, %p103
    %p105 = scmp.ne.s32.totalorder %s96, %s97
    %p106 = scmp.eq.s32.totalorder %s18, 0
    %p107 = por %p105, %p106
    %p108 = scmp.ne.s32.totalorder %s96, %s97
    %p109 = scmp.eq.s32.totalorder %s19, 1
    %p110 = por %p108, %p109
    %p112 = scmp.ne.s32.totalorder %s97, %s111
    %p113 = scmp.eq.s32.totalorder %s19, 0
    %p114 = por %p112, %p113
    %s116 = sadd.s32 %s115, 1
    %p119 = scmp.eq.s32.totalorder %s13, 1
    %p120 = scmp.ne.s32.totalorder %s115, %s117
    %p121 = scmp.eq.s32.totalorder %s13, 0
    %p122 = por %p120, %p121
    %p123 = scmp.ne.s32.totalorder %s115, %s117
    %p124 = scmp.eq.s32.totalorder %s18, 1
    %p125 = por %p123, %p124
    %p126 = scmp.ne.s32.totalorder %s117, %s118
    %p127 = scmp.eq.s32.totalorder %s18, 0
    %p128 = por %p126, %p127
    %p129 = scmp.ne.s32.totalorder %s117, %s118
    %p130 = scmp.eq.s32.totalorder %s19, 1
    %p131 = por %p129, %p130
    %p133 = scmp.ne.s32.totalorder %s118, %s132
    %p134 = scmp.eq.s32.totalorder %s19, 0
    %p135 = por %p133, %p134
    %s137 = sadd.s32 %s136, 1
    %p140 = scmp.eq.s32.totalorder %s13, 1
    %p141 = scmp.ne.s32.totalorder %s136, %s138
    %p142 = scmp.eq.s32.totalorder %s13, 0
    %p143 = por %p141, %p142
    %p144 = scmp.ne.s32.totalorder %s136, %s138
    %p145 = scmp.eq.s32.totalorder %s18, 1
    %p146 = por %p144, %p145
    %p147 = scmp.ne.s32.totalorder %s138, %s139
    %p148 = scmp.eq.s32.totalorder %s18, 0
    %p149 = por %p147, %p148
    %p150 = scmp.ne.s32.totalorder %s138, %s139
    %p151 = scmp.eq.s32.totalorder %s19, 1
    %p152 = por %p150, %p151
    %p154 = scmp.ne.s32.totalorder %s139, %s153
    %p155 = scmp.eq.s32.totalorder %s19, 0
    %p156 = por %p154, %p155
    %s157 = ssub.s32 %s13, %s20
    %p158 = scmp.eq.s32.totalorder %s157, 0
    %s160 = sadd.s32 %s159, 1
    %s161 = scalar_select %p158, %s159, %s160
    %p164 = pneg %p158
    %p165 = scmp.eq.s32.totalorder %s13, 1
    %p166 = por %p164, %p165
    %p167 = scmp.ne.s32.totalorder %s159, %s162
    %p168 = scmp.eq.s32.totalorder %s13, 0
    %p169 = por %p167, %p168
    %p170 = scmp.ne.s32.totalorder %s159, %s162
    %p171 = scmp.eq.s32.totalorder %s18, 1
    %p172 = por %p170, %p171
    %p173 = scmp.ne.s32.totalorder %s162, %s163
    %p174 = scmp.eq.s32.totalorder %s18, 0
    %p175 = por %p173, %p174
    %p176 = scmp.ne.s32.totalorder %s162, %s163
    %p177 = scmp.eq.s32.totalorder %s19, 1
    %p178 = por %p176, %p177
    %p180 = scmp.ne.s32.totalorder %s163, %s179
    %p181 = scmp.eq.s32.totalorder %s19, 0
    %p182 = por %p180, %p181
    %p183 = scmp.le.s32.totalorder 1, %s13
    %p184 = scmp.lt.s32.totalorder %s13, 3
    %p185 = pnand %p183, %p184
    %p186 = pneg %p185
    // Predicated region
    $region9: #{non_local_self_attention.1} parent=5 // pred_check
      _
    $region10: #{non_local_self_attention.1} parent=5 // pred_check_branch
      %188 = sbr.rel (%p185) target = $region12
    $region11: #{non_local_self_attention.1} parent=5 // pred_region
      %s189 = ssub.s32 %s13, 1
      // Predicated region
      $region13: #{non_local_self_attention.1} parent=11 // pred_check
        %p190 = pneg %p34
      $region14: #{non_local_self_attention.1} parent=11 // pred_check_branch
        %192 = sbr.rel (%p190) target = $region16
      $region15: #{non_local_self_attention.1} parent=11 // pred_region
        _
      $region16: #{non_local_self_attention.1} parent=11 // pred_fallthru
        _
      // Predicated region
      $region17: #{non_local_self_attention.1} parent=11 // pred_check
        %p193 = pneg %p107
      $region18: #{non_local_self_attention.1} parent=11 // pred_check_branch
        %195 = sbr.rel (%p193) target = $region20
      $region19: #{non_local_self_attention.1} parent=11 // pred_region
        _
      $region20: #{non_local_self_attention.1} parent=11 // pred_fallthru
        _
      // Predicated region
      $region21: #{non_local_self_attention.1} parent=11 // pred_check
        %p196 = pneg %p128
      $region22: #{non_local_self_attention.1} parent=11 // pred_check_branch
        %198 = sbr.rel (%p196) target = $region24
      $region23: #{non_local_self_attention.1} parent=11 // pred_region
        _
      $region24: #{non_local_self_attention.1} parent=11 // pred_fallthru
        _
      // Predicated region
      $region25: #{non_local_self_attention.1} parent=11 // pred_check
        %p199 = pneg %p149
      $region26: #{non_local_self_attention.1} parent=11 // pred_check_branch
        %201 = sbr.rel (%p199) target = $region28
      $region27: #{non_local_self_attention.1} parent=11 // pred_region
        _
      $region28: #{non_local_self_attention.1} parent=11 // pred_fallthru
        _
    $region12: #{non_local_self_attention.1} parent=5 // pred_fallthru
      _
    %p202 = scmp.lt.s32.totalorder %s13, 2
    // Predicated region
    $region29: #{non_local_self_attention.1} parent=5 // pred_check
      %p203 = pneg %p202
    $region30: #{non_local_self_attention.1} parent=5 // pred_check_branch
      %205 = sbr.rel (%p203) target = $region32
    $region31: #{non_local_self_attention.1} parent=5 // pred_region
      // Predicated region
      $region33: #{non_local_self_attention.1} parent=31 // pred_check
        %p206 = pneg %p54
      $region34: #{non_local_self_attention.1} parent=31 // pred_check_branch
        %208 = sbr.rel (%p206) target = $region36
      $region35: #{non_local_self_attention.1} parent=31 // pred_region
        %p209 = scmp.lt.s32.totalorder %s13, 1
        %s210 = scalar_select %p209, %s13, 1
        %s211 = smul.addr %s210, 4
        %s212 = smul.addr %s211, 8
        %s213 = scalar_lea.vmem %s1, %s212
      $region36: #{non_local_self_attention.1} parent=31 // pred_fallthru
        _
      // Predicated region
      $region37: #{non_local_self_attention.1} parent=31 // pred_check
        %p214 = pneg %p80
      $region38: #{non_local_self_attention.1} parent=31 // pred_check_branch
        %216 = sbr.rel (%p214) target = $region40
      $region39: #{non_local_self_attention.1} parent=31 // pred_region
        %p217 = scmp.lt.s32.totalorder %s13, 1
        %s218 = scalar_select %p217, %s13, 1
        %s219 = smul.addr %s218, 4
        %s220 = smul.addr %s219, 4
        %s221 = scalar_lea.vmem %s2, %s220
      $region40: #{non_local_self_attention.1} parent=31 // pred_fallthru
        _
    $region32: #{non_local_self_attention.1} parent=5 // pred_fallthru
      _
    %p222 = scmp.le.s32.totalorder 1, %s13
    %p223 = scmp.lt.s32.totalorder %s13, 3
    %p224 = pnand %p222, %p223
    %p225 = pneg %p224
    // Predicated region
    $region41: #{non_local_self_attention.1} parent=5 // pred_check
      _
    $region42: #{non_local_self_attention.1} parent=5 // pred_check_branch
      %227 = sbr.rel (%p224) target = $region44
    $region43: #{non_local_self_attention.1} parent=5 // pred_region
      %s228 = ssub.s32 %s13, 1
      %p229 = pneg %p34
      %p230 = pneg %p31
      %p231 = scmp.lt.s32.totalorder %s18, 1
      %s232 = scalar_select %p231, %s18, 1
      %s233 = smul.addr %s232, 4
      %s234 = smul.addr %s233, 8
      %s235 = scalar_lea.vmem %s1, %s234
      %p236 = pneg %p60
      %p237 = pneg %p57
      %p238 = scmp.lt.s32.totalorder %s18, 1
      %s239 = scalar_select %p238, %s18, 1
      %s240 = smul.addr %s239, 4
      %s241 = smul.addr %s240, 4
      %s242 = scalar_lea.vmem %s2, %s241
      %p243 = pneg %p86
      %p244 = pneg %p83
      %p245 = pneg %p107
      %p246 = pneg %p104
      %p247 = pneg %p128
      %p248 = pneg %p125
      %p249 = pneg %p149
      %p250 = pneg %p146
      %p251 = pneg %p175
      %p252 = pneg %p172
      %p253 = scmp.lt.s32.totalorder %s18, 1
      %s254 = scalar_select %p253, %s18, 1
      %s255 = smul.addr %s254, 4
      %s256 = smul.addr %s255, 8
      %s257 = scalar_lea.vmem %s6, %s256
      %p258 = scmp.lt.s32.totalorder %s18, 1
      %s259 = scalar_select %p258, %s18, 1
      %s260 = smul.addr %s259, 4
      %s261 = smul.addr %s260, 8
      %s262 = scalar_lea.vmem %s1, %s261
      %p263 = scmp.lt.s32.totalorder %s18, 1
      %s264 = scalar_select %p263, %s18, 1
      %s265 = smul.addr %s264, 4
      %s266 = smul.addr %s265, 4
      %s267 = scalar_lea.vmem %s2, %s266
      %p268 = scmp.lt.s32.totalorder %s18, 1
      %s269 = scalar_select %p268, %s18, 1
      %s270 = smul.addr %s269, 4
      %s271 = smul.addr %s270, 8
      %s272 = scalar_lea.vmem %s6, %s271
      %v274 = vld [vmem:[%s262] sm:$0xff]
      %v275 = vld [vmem:[%s262 + $0x8] sm:$0xff]
      %v276 = vld [vmem:[%s262 + $0x10] sm:$0xff]
      %v277 = vld [vmem:[%s262 + $0x18] sm:$0xff]
      %v278 = vpack.c.bf16 %v275, %v274
      %v279 = vpack.c.bf16 %v277, %v276
      %v280 = vld [vmem:[%s267] sm:$0xf]
      %v281 = vld [vmem:[%s267 + $0x4] sm:$0xf]
      %v282 = vld [vmem:[%s267 + $0x8] sm:$0xf]
      %v283 = vld [vmem:[%s267 + $0xc] sm:$0xf]
      %v284 = vld [vmem:[%s4] sm:$0xf]
      %v285 = vld [vmem:[%s4 + $0x4] sm:$0xf]
      %v286 = vld [vmem:[%s4 + $0x8] sm:$0x3]
      %v290 = vunpack.c.l.b16 %v284
      %v291 = vunpack.c.l.b16 %v285
      %v292 = vunpack.c.l.b16 %v286
      %v293 = vpack.c.b16 %v291, %v290
      %v294 = vpack.c.b16 %v292, %v292
      %vm295 = vcmask 261120
      %v297 = vsel %vm295, %v293, 0
      %v300 = vsel %vm295, %v294, 0
      %302 = vmatprep.subr.bf16.mxu0 0
      %303 = vmatpush1.bf16.msra.mxu0 %v278
      %304 = vmatprep.subr.bf16.mxu0 0
      %305 = vmatpush1.bf16.msra.mxu0 %v279
      %306 = vmatprep.subr.bf16.mxu0 0
      %307 = vmatpush1.bf16.msra.mxu0 0
      %308 = vmatprep.subr.bf16.mxu0 0
      %309 = vmatpush1.bf16.msra.mxu0 0
      %310 = vmatprep.subr.bf16.mxu0 0
      %311 = vmatpush1.bf16.msra.mxu0 0
      %312 = vmatprep.subr.bf16.mxu0 0
      %313 = vmatpush1.bf16.msra.mxu0 0
      %314 = vmatprep.subr.bf16.mxu0 0
      %315 = vmatpush1.bf16.msra.mxu0 0
      %316 = vmatprep.subr.bf16.mxu0 0
      %317 = vmatpush1.bf16.msra.mxu0 0
      %318 = vmatprep.subr.bf16.mxu0 0
      %319 = vmatpush1.bf16.msra.mxu0 0
      %320 = vmatprep.subr.bf16.mxu0 0
      %321 = vmatpush1.bf16.msra.mxu0 0
      %322 = vmatprep.subr.bf16.mxu0 0
      %323 = vmatpush1.bf16.msra.mxu0 0
      %324 = vmatprep.subr.bf16.mxu0 0
      %325 = vmatpush1.bf16.msra.mxu0 0
      %326 = vmatprep.subr.bf16.mxu0 0
      %327 = vmatpush1.bf16.msra.mxu0 0
      %328 = vmatprep.subr.bf16.mxu0 0
      %329 = vmatpush1.bf16.msra.mxu0 0
      %330 = vmatprep.subr.bf16.mxu0 0
      %331 = vmatpush1.bf16.msra.mxu0 0
      %332 = vmatprep.subr.bf16.mxu0 0
      %333 = vmatpush1.bf16.msra.mxu0 0
      %334 = vmatprep.mubr.bf16.mxu0 0
      %335 = vmatmul.mubr.bf16.gmra.mrb[0].mxu0 %v297
      %v336 = vpop.f32.mrb[0].mxu0
      %v337 = vadd.f32 0.0, %v336
      %v338 = vpop.f32.mrb[0].mxu0
      %v339 = vpop.f32.mrb[0].mxu0
      %v340 = vadd.f32 0.0, %v339
      %v341 = vpop.f32.mrb[0].mxu0
      %342 = vmatprep.mubr.bf16.mxu0 0
      %343 = vmatmul.mubr.bf16.gmra.mrb[0].mxu0 %v300
      %v344 = vpop.f32.mrb[0].mxu0
      %v345 = vadd.f32 0.0, %v344
      %v346 = vpop.f32.mrb[0].mxu0
      %v347 = vpop.f32.mrb[0].mxu0
      %v348 = vpop.f32.mrb[0].mxu0
      %349 = vdwg.mxu0
      %v350 = vld [vmem:[%s3] sm:$0xf]
      %v351 = vld [vmem:[%s3 + $0x4] sm:$0xf]
      %v352 = vld [vmem:[%s3 + $0x8] sm:$0xf]
      %v353 = vld [vmem:[%s3 + $0xc] sm:$0xf]
      %v358 = vunpack.c.l.b16 %v280
      %v359 = vunpack.c.l.b16 %v281
      %v360 = vunpack.c.l.b16 %v282
      %v361 = vunpack.c.l.b16 %v283
      %v362 = vpack.c.b16 %v359, %v358
      %v363 = vpack.c.b16 %v361, %v360
      %v368 = vunpack.c.l.b16 %v350
      %v369 = vunpack.c.l.b16 %v351
      %v370 = vunpack.c.l.b16 %v352
      %v371 = vunpack.c.l.b16 %v353
      %v372 = vpack.c.b16 %v369, %v368
      %v373 = vpack.c.b16 %v371, %v370
      %v377 = vsel %vm295, %v362, 0
      %v380 = vsel %vm295, %v363, 0
      %382 = vmatprep.subr.bf16.mxu0 0
      %383 = vmatpush1.bf16.msra.mxu0 %v372
      %384 = vmatprep.subr.bf16.mxu0 0
      %385 = vmatpush1.bf16.msra.mxu0 %v373
      %386 = vmatprep.subr.bf16.mxu0 0
      %387 = vmatpush1.bf16.msra.mxu0 0
      %388 = vmatprep.subr.bf16.mxu0 0
      %389 = vmatpush1.bf16.msra.mxu0 0
      %390 = vmatprep.subr.bf16.mxu0 0
      %391 = vmatpush1.bf16.msra.mxu0 0
      %392 = vmatprep.subr.bf16.mxu0 0
      %393 = vmatpush1.bf16.msra.mxu0 0
      %394 = vmatprep.subr.bf16.mxu0 0
      %395 = vmatpush1.bf16.msra.mxu0 0
      %396 = vmatprep.subr.bf16.mxu0 0
      %397 = vmatpush1.bf16.msra.mxu0 0
      %398 = vmatprep.subr.bf16.mxu0 0
      %399 = vmatpush1.bf16.msra.mxu0 0
      %400 = vmatprep.subr.bf16.mxu0 0
      %401 = vmatpush1.bf16.msra.mxu0 0
      %402 = vmatprep.subr.bf16.mxu0 0
      %403 = vmatpush1.bf16.msra.mxu0 0
      %404 = vmatprep.subr.bf16.mxu0 0
      %405 = vmatpush1.bf16.msra.mxu0 0
      %406 = vmatprep.subr.bf16.mxu0 0
      %407 = vmatpush1.bf16.msra.mxu0 0
      %408 = vmatprep.subr.bf16.mxu0 0
      %409 = vmatpush1.bf16.msra.mxu0 0
      %410 = vmatprep.subr.bf16.mxu0 0
      %411 = vmatpush1.bf16.msra.mxu0 0
      %412 = vmatprep.subr.bf16.mxu0 0
      %413 = vmatpush1.bf16.msra.mxu0 0
      %414 = vmatprep.mubr.bf16.mxu0 0
      %415 = vmatmul.mubr.bf16.gmra.mrb[0].mxu0 %v377
      %v416 = vpop.f32.mrb[0].mxu0
      %v417 = vadd.f32 0.0, %v416
      %v418 = vpop.f32.mrb[0].mxu0
      %v419 = vpop.f32.mrb[0].mxu0
      %v420 = vadd.f32 0.0, %v419
      %v421 = vpop.f32.mrb[0].mxu0
      %422 = vmatprep.mubr.bf16.mxu0 0
      %423 = vmatmul.mubr.bf16.gmra.mrb[0].mxu0 %v380
      %v424 = vpop.f32.mrb[0].mxu0
      %v425 = vadd.f32 0.0, %v424
      %v426 = vpop.f32.mrb[0].mxu0
      %v427 = vpop.f32.mrb[0].mxu0
      %v428 = vadd.f32 0.0, %v427
      %v429 = vpop.f32.mrb[0].mxu0
      %430 = vdwg.mxu0
      %432 = vrot.lane.b32.xlu0 %v345, 112
      %v433 = vpop.permute.xlu0 %432
      %v435 = vmax.f32 %v345, %v433
      %v437 = vrot.slane %v435, 2
      %v439 = vmax.f32 %v435, %v437
      %441 = vrot.lane.b32.xlu0 %v337, 112
      %v442 = vpop.permute.xlu0 %441
      %v444 = vmax.f32 %v337, %v442
      %446 = vrot.lane.b32.xlu0 %v340, 112
      %v447 = vpop.permute.xlu0 %446
      %v449 = vmax.f32 %v340, %v447
      %v450 = vmax.f32 %v444, %v449
      %v451 = vpack.c.bf16 %v420, %v417
      %v452 = vpack.c.bf16 %v428, %v425
      %v453 = vpack.c.bf16 %v439, %v439
      %456 = vrot.lane.b32.xlu0 %v451, 126
      %v457 = vpop.permute.xlu0 %456
      %458 = vrot.lane.b32.xlu0 %v452, 126
      %v459 = vpop.permute.xlu0 %458
      %461 = vrot.lane.b32.xlu0 %v453, 120
      %v462 = vpop.permute.xlu0 %461
      %vm463 = vcmask 15360
      %v465 = vsel %vm463, %v457, 0
      %v468 = vsel %vm463, %v459, 0
      %vm470 = vcmask 1040384
      %v472 = vsel %vm470, %v462, 0
      %474 = vmatprep.subr.bf16.mxu0 0
      %475 = vmatpush1.bf16.msra.mxu0 %v472
      %476 = vmatprep.subr.bf16.mxu0 0
      %477 = vmatpush1.bf16.msra.mxu0 0
      %478 = vmatprep.subr.bf16.mxu0 0
      %479 = vmatpush1.bf16.msra.mxu0 0
      %480 = vmatprep.subr.bf16.mxu0 0
      %481 = vmatpush1.bf16.msra.mxu0 0
      %482 = vmatprep.subr.bf16.mxu0 0
      %483 = vmatpush1.bf16.msra.mxu0 0
      %484 = vmatprep.subr.bf16.mxu0 0
      %485 = vmatpush1.bf16.msra.mxu0 0
      %486 = vmatprep.subr.bf16.mxu0 0
      %487 = vmatpush1.bf16.msra.mxu0 0
      %488 = vmatprep.subr.bf16.mxu0 0
      %489 = vmatpush1.bf16.msra.mxu0 0
      %490 = vmatprep.subr.bf16.mxu0 0
      %491 = vmatpush1.bf16.msra.mxu0 0
      %492 = vmatprep.subr.bf16.mxu0 0
      %493 = vmatpush1.bf16.msra.mxu0 0
      %494 = vmatprep.subr.bf16.mxu0 0
      %495 = vmatpush1.bf16.msra.mxu0 0
      %496 = vmatprep.subr.bf16.mxu0 0
      %497 = vmatpush1.bf16.msra.mxu0 0
      %498 = vmatprep.subr.bf16.mxu0 0
      %499 = vmatpush1.bf16.msra.mxu0 0
      %500 = vmatprep.subr.bf16.mxu0 0
      %501 = vmatpush1.bf16.msra.mxu0 0
      %502 = vmatprep.subr.bf16.mxu0 0
      %503 = vmatpush1.bf16.msra.mxu0 0
      %504 = vmatprep.subr.bf16.mxu0 0
      %505 = vmatpush1.bf16.msra.mxu0 0
      %506 = vmatprep.mubr.bf16.mxu0 0
      %507 = vmatmul.mubr.bf16.gmra.mrb[0].mxu0 %v465
      %v508 = vpop.f32.mrb[0].mxu0
      %v509 = vadd.f32 0.0, %v508
      %v510 = vpop.f32.mrb[0].mxu0
      %v511 = vpop.f32.mrb[0].mxu0
      %v512 = vadd.f32 0.0, %v511
      %v513 = vpop.f32.mrb[0].mxu0
      %514 = vmatprep.mubr.bf16.mxu0 0
      %515 = vmatmul.mubr.bf16.gmra.mrb[0].mxu0 %v468
      %v516 = vpop.f32.mrb[0].mxu0
      %v517 = vadd.f32 0.0, %v516
      %v518 = vpop.f32.mrb[0].mxu0
      %v519 = vpop.f32.mrb[0].mxu0
      %v520 = vadd.f32 0.0, %v519
      %v521 = vpop.f32.mrb[0].mxu0
      %522 = vdwg.mxu0
      %v524 = vsel %vm463, %v451, 0
      %v527 = vsel %vm463, %v452, 0
      %v530 = vsel %vm470, %v453, 0
      %532 = vmatprep.subr.bf16.mxu0 0
      %533 = vmatpush1.bf16.msra.mxu0 %v530
      %534 = vmatprep.subr.bf16.mxu0 0
      %535 = vmatpush1.bf16.msra.mxu0 0
      %536 = vmatprep.subr.bf16.mxu0 0
      %537 = vmatpush1.bf16.msra.mxu0 0
      %538 = vmatprep.subr.bf16.mxu0 0
      %539 = vmatpush1.bf16.msra.mxu0 0
      %540 = vmatprep.subr.bf16.mxu0 0
      %541 = vmatpush1.bf16.msra.mxu0 0
      %542 = vmatprep.subr.bf16.mxu0 0
      %543 = vmatpush1.bf16.msra.mxu0 0
      %544 = vmatprep.subr.bf16.mxu0 0
      %545 = vmatpush1.bf16.msra.mxu0 0
      %546 = vmatprep.subr.bf16.mxu0 0
      %547 = vmatpush1.bf16.msra.mxu0 0
      %548 = vmatprep.subr.bf16.mxu0 0
      %549 = vmatpush1.bf16.msra.mxu0 0
      %550 = vmatprep.subr.bf16.mxu0 0
      %551 = vmatpush1.bf16.msra.mxu0 0
      %552 = vmatprep.subr.bf16.mxu0 0
      %553 = vmatpush1.bf16.msra.mxu0 0
      %554 = vmatprep.subr.bf16.mxu0 0
      %555 = vmatpush1.bf16.msra.mxu0 0
      %556 = vmatprep.subr.bf16.mxu0 0
      %557 = vmatpush1.bf16.msra.mxu0 0
      %558 = vmatprep.subr.bf16.mxu0 0
      %559 = vmatpush1.bf16.msra.mxu0 0
      %560 = vmatprep.subr.bf16.mxu0 0
      %561 = vmatpush1.bf16.msra.mxu0 0
      %562 = vmatprep.subr.bf16.mxu0 0
      %563 = vmatpush1.bf16.msra.mxu0 0
      %564 = vmatprep.mubr.bf16.mxu0 0
      %565 = vmatmul.mubr.bf16.gmra.mrb[0].mxu0 %v524
      %v566 = vpop.f32.mrb[0].mxu0
      %v567 = vadd.f32 %v509, %v566
      %v568 = vpop.f32.mrb[0].mxu0
      %v569 = vpop.f32.mrb[0].mxu0
      %v570 = vadd.f32 %v512, %v569
      %v571 = vpop.f32.mrb[0].mxu0
      %572 = vmatprep.mubr.bf16.mxu0 0
      %573 = vmatmul.mubr.bf16.gmra.mrb[0].mxu0 %v527
      %v574 = vpop.f32.mrb[0].mxu0
      %v575 = vadd.f32 %v517, %v574
      %v576 = vpop.f32.mrb[0].mxu0
      %v577 = vpop.f32.mrb[0].mxu0
      %v578 = vadd.f32 %v520, %v577
      %v579 = vpop.f32.mrb[0].mxu0
      %580 = vdwg.mxu0
      %vm581 = vcmask 64512
      %v582 = vsel %vm581, %v567, -inf
      %583 = vmax.xlane.f32.xlu0 %v582
      %v584 = vpop.xlane.xlu0 %583
      %v585 = vsel %vm581, %v570, -inf
      %586 = vmax.xlane.f32.xlu0 %v585
      %v587 = vpop.xlane.xlu0 %586
      %v588 = vsel %vm581, %v575, -inf
      %589 = vmax.xlane.f32.xlu0 %v588
      %v590 = vpop.xlane.xlu0 %589
      %v591 = vsel %vm581, %v578, -inf
      %592 = vmax.xlane.f32.xlu0 %v591
      %v593 = vpop.xlane.xlu0 %592
      %v594 = vsub.f32 %v567, %v584
      %v595 = vsub.f32 %v570, %v587
      %v596 = vsub.f32 %v575, %v590
      %v597 = vsub.f32 %v578, %v593
      %v598 = vmul.f32 %v594, 1.442695
      %v599 = vpow.pop %v598
      %v600 = vmul.f32 %v595, 1.442695
      %v601 = vpow.pop %v600
      %v602 = vmul.f32 %v596, 1.442695
      %v603 = vpow.pop %v602
      %v604 = vmul.f32 %v597, 1.442695
      %v605 = vpow.pop %v604
      %v606 = vsel %vm581, %v599, 0.0
      %607 = vadd.xlane.f32.xlu0 %v606
      %v608 = vpop.xlane.xlu0 %607
      %v609 = vsel %vm581, %v601, 0.0
      %610 = vadd.xlane.f32.xlu0 %v609
      %v611 = vpop.xlane.xlu0 %610
      %v612 = vsel %vm581, %v603, 0.0
      %613 = vadd.xlane.f32.xlu0 %v612
      %v614 = vpop.xlane.xlu0 %613
      %v615 = vsel %vm581, %v605, 0.0
      %616 = vadd.xlane.f32.xlu0 %v615
      %v617 = vpop.xlane.xlu0 %616
      %v618 = vrcp.pop %v608
      %v619 = vrcp.pop %v611
      %v620 = vrcp.pop %v614
      %v621 = vrcp.pop %v617
      %v622 = vmul.f32 %v599, %v618
      %v623 = vmul.f32 %v601, %v619
      %v624 = vmul.f32 %v603, %v620
      %v625 = vmul.f32 %v605, %v621
      %v626 = vpack.c.bf16 %v623, %v622
      %v627 = vpack.c.bf16 %v625, %v624
      %v628 = vpack.c.bf16 %v450, %v450
      %v630 = vsel %vm581, %v628, 0
      %v633 = vsel %vm581, %v626, 0
      %v636 = vsel %vm581, %v627, 0
      %638 = vmatprep.subr.bf16.mxu0 0
      %639 = vmatpush1.bf16.xpose.msra.mxu0 %v633
      %640 = vmatprep.subr.bf16.mxu0 0
      %641 = vmatpush1.bf16.xpose.msra.mxu0 %v636
      %642 = vmatprep.subr.bf16.mxu0 0
      %643 = vmatpush1.bf16.xpose.msra.mxu0 0
      %644 = vmatprep.subr.bf16.mxu0 0
      %645 = vmatpush1.bf16.xpose.msra.mxu0 0
      %646 = vmatprep.subr.bf16.mxu0 0
      %647 = vmatpush1.bf16.xpose.msra.mxu0 0
      %648 = vmatprep.subr.bf16.mxu0 0
      %649 = vmatpush1.bf16.xpose.msra.mxu0 0
      %650 = vmatprep.subr.bf16.mxu0 0
      %651 = vmatpush1.bf16.xpose.msra.mxu0 0
      %652 = vmatprep.subr.bf16.mxu0 0
      %653 = vmatpush1.bf16.xpose.msra.mxu0 0
      %654 = vmatprep.subr.bf16.mxu0 0
      %655 = vmatpush1.bf16.xpose.msra.mxu0 0
      %656 = vmatprep.subr.bf16.mxu0 0
      %657 = vmatpush1.bf16.xpose.msra.mxu0 0
      %658 = vmatprep.subr.bf16.mxu0 0
      %659 = vmatpush1.bf16.xpose.msra.mxu0 0
      %660 = vmatprep.subr.bf16.mxu0 0
      %661 = vmatpush1.bf16.xpose.msra.mxu0 0
      %662 = vmatprep.subr.bf16.mxu0 0
      %663 = vmatpush1.bf16.xpose.msra.mxu0 0
      %664 = vmatprep.subr.bf16.mxu0 0
      %665 = vmatpush1.bf16.xpose.msra.mxu0 0
      %666 = vmatprep.subr.bf16.mxu0 0
      %667 = vmatpush1.bf16.xpose.msra.mxu0 0
      %668 = vmatprep.subr.bf16.mxu0 0
      %669 = vmatpush1.bf16.xpose.msra.mxu0 0
      %670 = vmatprep.mubr.bf16.mxu0 0
      %671 = vmatmul.mubr.bf16.gmra.mrb[0].mxu0 %v630
      %v672 = vpop.f32.mrb[0].mxu0
      %v673 = vadd.f32 0.0, %v672
      %v674 = vpop.f32.mrb[0].mxu0
      %v675 = vpop.f32.mrb[0].mxu0
      %v676 = vpop.f32.mrb[0].mxu0
      %677 = vdwg.mxu0
      %679 = vrot.lane.b32.xlu0 %v628, 120
      %v680 = vpop.permute.xlu0 %679
      %v682 = vsel %vm581, %v680, 0
      %684 = vmatprep.subr.bf16.mxu0 0
      %685 = vmatpush1.bf16.xpose.msra.mxu0 %v633
      %686 = vmatprep.subr.bf16.mxu0 0
      %687 = vmatpush1.bf16.xpose.msra.mxu0 %v636
      %688 = vmatprep.subr.bf16.mxu0 0
      %689 = vmatpush1.bf16.xpose.msra.mxu0 0
      %690 = vmatprep.subr.bf16.mxu0 0
      %691 = vmatpush1.bf16.xpose.msra.mxu0 0
      %692 = vmatprep.subr.bf16.mxu0 0
      %693 = vmatpush1.bf16.xpose.msra.mxu0 0
      %694 = vmatprep.subr.bf16.mxu0 0
      %695 = vmatpush1.bf16.xpose.msra.mxu0 0
      %696 = vmatprep.subr.bf16.mxu0 0
      %697 = vmatpush1.bf16.xpose.msra.mxu0 0
      %698 = vmatprep.subr.bf16.mxu0 0
      %699 = vmatpush1.bf16.xpose.msra.mxu0 0
      %700 = vmatprep.subr.bf16.mxu0 0
      %701 = vmatpush1.bf16.xpose.msra.mxu0 0
      %702 = vmatprep.subr.bf16.mxu0 0
      %703 = vmatpush1.bf16.xpose.msra.mxu0 0
      %704 = vmatprep.subr.bf16.mxu0 0
      %705 = vmatpush1.bf16.xpose.msra.mxu0 0
      %706 = vmatprep.subr.bf16.mxu0 0
      %707 = vmatpush1.bf16.xpose.msra.mxu0 0
      %708 = vmatprep.subr.bf16.mxu0 0
      %709 = vmatpush1.bf16.xpose.msra.mxu0 0
      %710 = vmatprep.subr.bf16.mxu0 0
      %711 = vmatpush1.bf16.xpose.msra.mxu0 0
      %712 = vmatprep.subr.bf16.mxu0 0
      %713 = vmatpush1.bf16.xpose.msra.mxu0 0
      %714 = vmatprep.subr.bf16.mxu0 0
      %715 = vmatpush1.bf16.xpose.msra.mxu0 0
      %716 = vmatprep.mubr.bf16.mxu0 0
      %717 = vmatmul.mubr.bf16.gmra.mrb[0].mxu0 %v682
      %v718 = vpop.f32.mrb[0].mxu0
      %v719 = vadd.f32 0.0, %v718
      %v720 = vpop.f32.mrb[0].mxu0
      %v721 = vpop.f32.mrb[0].mxu0
      %v722 = vpop.f32.mrb[0].mxu0
      %723 = vdwg.mxu0
      %v724 = vld [vmem:[%s5] sm:$0xf]
      %v725 = vld [vmem:[%s5 + $0x4] sm:$0xf]
      %v726 = vld [vmem:[%s5 + $0x8] sm:$0xf]
      %v727 = vld [vmem:[%s5 + $0xc] sm:$0xf]
      %v728 = vpack.c.bf16 %v673, %v673
      %v729 = vpack.c.bf16 %v719, %v719
      %v734 = vunpack.c.l.b16 %v724
      %v735 = vunpack.c.l.b16 %v725
      %v736 = vunpack.c.l.b16 %v726
      %v737 = vunpack.c.l.b16 %v727
      %v738 = vpack.c.b16 %v735, %v734
      %v739 = vpack.c.b16 %v737, %v736
      %740 = vrot.lane.b32.xlu0 %v738, 120
      %v741 = vpop.permute.xlu0 %740
      %742 = vrot.lane.b32.xlu0 %v739, 120
      %v743 = vpop.permute.xlu0 %742
      %v745 = vsel %vm581, %v741, 0
      %v748 = vsel %vm581, %v743, 0
      %vm750 = vcmask 1043456
      %v752 = vsel %vm750, %v729, 0
      %754 = vmatprep.subr.bf16.mxu0 0
      %755 = vmatpush1.bf16.msra.mxu0 %v752
      %756 = vmatprep.subr.bf16.mxu0 0
      %757 = vmatpush1.bf16.msra.mxu0 0
      %758 = vmatprep.subr.bf16.mxu0 0
      %759 = vmatpush1.bf16.msra.mxu0 0
      %760 = vmatprep.subr.bf16.mxu0 0
      %761 = vmatpush1.bf16.msra.mxu0 0
      %762 = vmatprep.subr.bf16.mxu0 0
      %763 = vmatpush1.bf16.msra.mxu0 0
      %764 = vmatprep.subr.bf16.mxu0 0
      %765 = vmatpush1.bf16.msra.mxu0 0
      %766 = vmatprep.subr.bf16.mxu0 0
      %767 = vmatpush1.bf16.msra.mxu0 0
      %768 = vmatprep.subr.bf16.mxu0 0
      %769 = vmatpush1.bf16.msra.mxu0 0
      %770 = vmatprep.subr.bf16.mxu0 0
      %771 = vmatpush1.bf16.msra.mxu0 0
      %772 = vmatprep.subr.bf16.mxu0 0
      %773 = vmatpush1.bf16.msra.mxu0 0
      %774 = vmatprep.subr.bf16.mxu0 0
      %775 = vmatpush1.bf16.msra.mxu0 0
      %776 = vmatprep.subr.bf16.mxu0 0
      %777 = vmatpush1.bf16.msra.mxu0 0
      %778 = vmatprep.subr.bf16.mxu0 0
      %779 = vmatpush1.bf16.msra.mxu0 0
      %780 = vmatprep.subr.bf16.mxu0 0
      %781 = vmatpush1.bf16.msra.mxu0 0
      %782 = vmatprep.subr.bf16.mxu0 0
      %783 = vmatpush1.bf16.msra.mxu0 0
      %784 = vmatprep.subr.bf16.mxu0 0
      %785 = vmatpush1.bf16.msra.mxu0 0
      %786 = vmatprep.mubr.bf16.mxu0 0
      %787 = vmatmul.mubr.bf16.gmra.mrb[0].mxu0 %v745
      %v788 = vpop.f32.mrb[0].mxu0
      %v789 = vadd.f32 0.0, %v788
      %v790 = vpop.f32.mrb[0].mxu0
      %v791 = vpop.f32.mrb[0].mxu0
      %v792 = vadd.f32 0.0, %v791
      %v793 = vpop.f32.mrb[0].mxu0
      %794 = vmatprep.mubr.bf16.mxu0 0
      %795 = vmatmul.mubr.bf16.gmra.mrb[0].mxu0 %v748
      %v796 = vpop.f32.mrb[0].mxu0
      %v797 = vadd.f32 0.0, %v796
      %v798 = vpop.f32.mrb[0].mxu0
      %v799 = vpop.f32.mrb[0].mxu0
      %v800 = vadd.f32 0.0, %v799
      %v801 = vpop.f32.mrb[0].mxu0
      %802 = vdwg.mxu0
      %v804 = vsel %vm581, %v738, 0
      %v807 = vsel %vm581, %v739, 0
      %v810 = vsel %vm750, %v728, 0
      %812 = vmatprep.subr.bf16.mxu0 0
      %813 = vmatpush1.bf16.msra.mxu0 %v810
      %814 = vmatprep.subr.bf16.mxu0 0
      %815 = vmatpush1.bf16.msra.mxu0 0
      %816 = vmatprep.subr.bf16.mxu0 0
      %817 = vmatpush1.bf16.msra.mxu0 0
      %818 = vmatprep.subr.bf16.mxu0 0
      %819 = vmatpush1.bf16.msra.mxu0 0
      %820 = vmatprep.subr.bf16.mxu0 0
      %821 = vmatpush1.bf16.msra.mxu0 0
      %822 = vmatprep.subr.bf16.mxu0 0
      %823 = vmatpush1.bf16.msra.mxu0 0
      %824 = vmatprep.subr.bf16.mxu0 0
      %825 = vmatpush1.bf16.msra.mxu0 0
      %826 = vmatprep.subr.bf16.mxu0 0
      %827 = vmatpush1.bf16.msra.mxu0 0
      %828 = vmatprep.subr.bf16.mxu0 0
      %829 = vmatpush1.bf16.msra.mxu0 0
      %830 = vmatprep.subr.bf16.mxu0 0
      %831 = vmatpush1.bf16.msra.mxu0 0
      %832 = vmatprep.subr.bf16.mxu0 0
      %833 = vmatpush1.bf16.msra.mxu0 0
      %834 = vmatprep.subr.bf16.mxu0 0
      %835 = vmatpush1.bf16.msra.mxu0 0
      %836 = vmatprep.subr.bf16.mxu0 0
      %837 = vmatpush1.bf16.msra.mxu0 0
      %838 = vmatprep.subr.bf16.mxu0 0
      %839 = vmatpush1.bf16.msra.mxu0 0
      %840 = vmatprep.subr.bf16.mxu0 0
      %841 = vmatpush1.bf16.msra.mxu0 0
      %842 = vmatprep.subr.bf16.mxu0 0
      %843 = vmatpush1.bf16.msra.mxu0 0
      %844 = vmatprep.mubr.bf16.mxu0 0
      %845 = vmatmul.mubr.bf16.gmra.mrb[0].mxu0 %v804
      %v846 = vpop.f32.mrb[0].mxu0
      %v847 = vadd.f32 %v789, %v846
      %v848 = vpop.f32.mrb[0].mxu0
      %v849 = vpop.f32.mrb[0].mxu0
      %v850 = vadd.f32 %v792, %v849
      %v851 = vpop.f32.mrb[0].mxu0
      %852 = vmatprep.mubr.bf16.mxu0 0
      %853 = vmatmul.mubr.bf16.gmra.mrb[0].mxu0 %v807
      %v854 = vpop.f32.mrb[0].mxu0
      %v855 = vadd.f32 %v797, %v854
      %v856 = vpop.f32.mrb[0].mxu0
      %v857 = vpop.f32.mrb[0].mxu0
      %v858 = vadd.f32 %v800, %v857
      %v859 = vpop.f32.mrb[0].mxu0
      %860 = vdwg.mxu0
      %s861 = sld [smem:[#allocation2]]
      %v862 = vstv %s861
      %v863 = vmul.f32 %v862, %v847
      %v864 = vmul.f32 %v862, %v850
      %v865 = vmul.f32 %v862, %v855
      %v866 = vmul.f32 %v862, %v858
      %v867 = vadd.f32 %v274, %v863
      %v868 = vadd.f32 %v275, %v864
      %v869 = vadd.f32 %v276, %v865
      %v870 = vadd.f32 %v277, %v866
      %871 = vst.msk [vmem:[%s272] sm:$0xff] %vm295, %v867
      %872 = vst.msk [vmem:[%s272 + $0x8] sm:$0xff] %vm295, %v868
      %873 = vst.msk [vmem:[%s272 + $0x10] sm:$0xff] %vm295, %v869
      %874 = vst.msk [vmem:[%s272 + $0x18] sm:$0xff] %vm295, %v870
      %p875 = scmp.lt.s32.totalorder %s18, 1
      %s876 = scalar_select %p875, %s18, 1
      %s877 = smul.addr %s876, 4
      %s878 = smul.addr %s877, 8
      %s879 = scalar_lea.vmem %s6, %s878
      // Predicated region
      $region45: #{non_local_self_attention.1} parent=43 // pred_check
        %p880 = pneg %p172
      $region46: #{non_local_self_attention.1} parent=43 // pred_check_branch
        %882 = sbr.rel (%p880) target = $region48
      $region47: #{non_local_self_attention.1} parent=43 // pred_region
        _
      $region48: #{non_local_self_attention.1} parent=43 // pred_fallthru
        _
    $region44: #{non_local_self_attention.1} parent=5 // pred_fallthru
      _
    %p883 = scmp.le.s32.totalorder 2, %s13
    // Predicated region
    $region49: #{non_local_self_attention.1} parent=5 // pred_check
      %p884 = pneg %p883
    $region50: #{non_local_self_attention.1} parent=5 // pred_check_branch
      %886 = sbr.rel (%p884) target = $region52
    $region51: #{non_local_self_attention.1} parent=5 // pred_region
      %s887 = ssub.s32 %s13, 2
      // Predicated region
      $region53: #{non_local_self_attention.1} parent=51 // pred_check
        %p888 = pneg %p178
      $region54: #{non_local_self_attention.1} parent=51 // pred_check_branch
        %890 = sbr.rel (%p888) target = $region56
      $region55: #{non_local_self_attention.1} parent=51 // pred_region
        %p891 = scmp.lt.s32.totalorder %s19, 1
        %s892 = scalar_select %p891, %s19, 1
        %s893 = smul.addr %s892, 4
        %s894 = smul.addr %s893, 8
        %s895 = scalar_lea.vmem %s6, %s894
      $region56: #{non_local_self_attention.1} parent=51 // pred_fallthru
        _
    $region52: #{non_local_self_attention.1} parent=5 // pred_fallthru
      _
  $region6: #{non_local_self_attention.1} parent=0 // loop_footer
    %s17 = sadd.s32 1, %s13
  $region7: #{non_local_self_attention.1} parent=0 // loop_footer_branch
    %12 = sbr.rel target = $region3
  $region8: #{non_local_self_attention.1} parent=0 // loop_exit
    _

</llo_original>
